<compile_context>
chip_gen: v5e
topology: v5e:2x2
jax: 0.10.0
libtpu: 0.0.40
codegen_flags: <defaults>
</compile_context>

<pallas_src>
import jax
import jax.numpy as jnp
from jax.experimental import pallas as pl
from jax.experimental.pallas import tpu as pltpu


# --------------------------------------------------------------------------
# One-time parameter preparation (do this at model init, NOT per forward).
# --------------------------------------------------------------------------
def prepare_timestep_embedding_params(linear_1_weight, linear_1_bias,
                                      linear_2_weight, linear_2_bias,
                                      cond_proj_weight=None,
                                      weight_dtype=jnp.bfloat16):
    """Transpose nn.Linear weights to (in, out) layout and cast to bf16 once.

    linear_1_weight: (time_embed_dim, in_channels)      -- nn.Linear layout
    linear_2_weight: (time_embed_dim_out, time_embed_dim)
    cond_proj_weight: optional (in_channels, cond_proj_dim), bias=False
    """
    params = {
        "w1": jnp.asarray(linear_1_weight).T.astype(weight_dtype),
        "b1": jnp.asarray(linear_1_bias).reshape(1, -1).astype(jnp.float32),
        "w2": jnp.asarray(linear_2_weight).T.astype(weight_dtype),
        "b2": jnp.asarray(linear_2_bias).reshape(1, -1).astype(jnp.float32),
    }
    if cond_proj_weight is not None:
        params["wc"] = jnp.asarray(cond_proj_weight).T.astype(weight_dtype)
    return params


# --------------------------------------------------------------------------
# Kernels
# --------------------------------------------------------------------------
def _silu(x):
    # x * sigmoid(x). exp -> EUP, approx reciprocal -> EUP, VALU stays free.
    return x * pl.reciprocal(1.0 + jnp.exp(-x), approx=True)


def _timestep_embed_kernel(x_ref, w1_ref, b1_ref, w2_ref, b2_ref, o_ref):
    # x_ref : (tb, C_in) f32   w1_ref: (C_in, H) bf16   b1_ref: (1, H) f32
    # w2_ref: (H, H_out) bf16  b2_ref: (1, H_out) f32   o_ref : (tb, H_out)
    x = x_ref[...].astype(w1_ref.dtype)
    h = jnp.dot(x, w1_ref[...], preferred_element_type=jnp.float32)
    h = _silu(h + b1_ref[...])
    y = jnp.dot(h.astype(w2_ref.dtype), w2_ref[...],
                preferred_element_type=jnp.float32)
    o_ref[...] = (y + b2_ref[...]).astype(o_ref.dtype)


def _timestep_embed_cond_kernel(x_ref, c_ref, wc_ref, w1_ref, b1_ref,
                                w2_ref, b2_ref, o_ref):
    # Adds the bias-free cond_proj matmul in front of the same fused MLP.
    c = c_ref[...].astype(wc_ref.dtype)
    x = x_ref[...] + jnp.dot(c, wc_ref[...],
                             preferred_element_type=jnp.float32)
    h = jnp.dot(x.astype(w1_ref.dtype), w1_ref[...],
                preferred_element_type=jnp.float32)
    h = _silu(h + b1_ref[...])
    y = jnp.dot(h.astype(w2_ref.dtype), w2_ref[...],
                preferred_element_type=jnp.float32)
    o_ref[...] = (y + b2_ref[...]).astype(o_ref.dtype)


# --------------------------------------------------------------------------
# Wrapper
# --------------------------------------------------------------------------
def timestep_embedding(sample, params, condition=None, *, block_b=512):
    """Fused TimestepEmbedding forward.

    sample: (B, in_channels), params from prepare_timestep_embedding_params(),
    condition: optional (B, cond_proj_dim). Returns (B, time_embed_dim_out) f32.
    """
    w1, b1, w2, b2 = params["w1"], params["b1"], params["w2"], params["b2"]
    c_in, H = w1.shape
    H_out = w2.shape[1]
    B = sample.shape[0]

    sample = sample.astype(jnp.float32)
    if condition is not None:
        condition = condition.astype(jnp.float32)
        c_dim = condition.shape[1]

    # Pad tiny batches up to a sublane multiple (8) so the tile fills whole
    # sublanes; slice the result back afterwards.
    B_pad = max(8, ((B + 7) // 8) * 8)
    if B_pad != B:
        sample = jnp.pad(sample, ((0, B_pad - B), (0, 0)))
        if condition is not None:
            condition = jnp.pad(condition, ((0, B_pad - B), (0, 0)))

    # Batch tiling: single tile for small B, otherwise block_b-row tiles
    # ("parallel" axis -> megacore sharding on v7x when >1 tile exists).
    tb = B_pad if B_pad <= block_b else block_b
    grid = (pl.cdiv(B_pad, tb),)

    const = lambda i: (0, 0)   # weights: constant index -> resident in VMEM
    row = lambda i: (i, 0)     # batch-tiled operands

    def _wspec(shape):
        # Constant blocks never change -> a single VMEM copy is enough.
        return pl.BlockSpec(shape, const, pipeline_mode=pl.Buffered(buffer_count=1))

    w_specs = [
        _wspec((c_in, H)),
        _wspec((1, H)),
        _wspec((H, H_out)),
        _wspec((1, H_out)),
    ]

    nbytes = lambda a: int(a.size) * int(a.dtype.itemsize)
    weight_bytes = nbytes(w1) + nbytes(b1) + nbytes(w2) + nbytes(b2)
    flops = 2 * B_pad * (c_in * H + H * H_out)
    io_bytes = B_pad * c_in * 4 + B_pad * H_out * 4

    if condition is None:
        kernel = _timestep_embed_kernel
        in_specs = [pl.BlockSpec((tb, c_in), row)] + w_specs
        args = (sample, w1, b1, w2, b2)
        act_vmem = 2 * (tb * c_in * 4 + tb * H_out * 4)
    else:
        wc = params["wc"]
        kernel = _timestep_embed_cond_kernel
        in_specs = ([pl.BlockSpec((tb, c_in), row),
                     pl.BlockSpec((tb, c_dim), row),
                     _wspec((c_dim, c_in))] + w_specs)
        args = (sample, condition, wc, w1, b1, w2, b2)
        weight_bytes += nbytes(wc)
        flops += 2 * B_pad * c_dim * c_in
        io_bytes += B_pad * c_dim * 4
        act_vmem = 2 * (tb * c_in * 4 + tb * c_dim * 4 + tb * H_out * 4)

    # Explicit VMEM budget: single-buffered weights + double-buffered
    # activations + the f32 intermediate, with headroom (capped well below
    # v7x's 64 MiB physical VMEM).
    vmem_need = weight_bytes + act_vmem + tb * H * 4
    vmem_limit = int(min(max(2 * vmem_need, 16 << 20), 48 << 20))

    cost = pl.CostEstimate(flops=int(flops),
                           transcendentals=int(B_pad * H),
                           bytes_accessed=int(weight_bytes + io_bytes))

    out = pl.pallas_call(
        kernel,
        out_shape=jax.ShapeDtypeStruct((B_pad, H_out), jnp.float32),
        grid=grid,
        in_specs=in_specs,
        out_specs=pl.BlockSpec((tb, H_out), row),
        compiler_params=pltpu.CompilerParams(
            dimension_semantics=("parallel",),
            vmem_limit_bytes=vmem_limit),
        cost_estimate=cost,
    )(*args)

    if B_pad != B:
        out = out[:B]
    return out


# --------------------------------------------------------------------------
# Self-test
# --------------------------------------------------------------------------
if __name__ == "__main__":
    # Small shapes consistent with the module: batch=2, in_channels=32,
    # time_embed_dim=128 (out_dim defaults to time_embed_dim), cond_dim=16.
    B, C_IN, H = 2, 32, 128
    COND_DIM = 16

    key = jax.random.PRNGKey(0)
    ks = jax.random.split(key, 5)

    def linear_init(k, fan_out, fan_in):
        # PyTorch nn.Linear default init: U(-1/sqrt(fan_in), 1/sqrt(fan_in)).
        bound = 1.0 / (fan_in ** 0.5)
        kw, kb = jax.random.split(k)
        w = jax.random.uniform(kw, (fan_out, fan_in), jnp.float32, -bound, bound)
        b = jax.random.uniform(kb, (fan_out,), jnp.float32, -bound, bound)
        return w, b

    sample = jax.random.normal(ks[0], (B, C_IN), dtype=jnp.float32)
    w1, b1 = linear_init(ks[1], H, C_IN)
    w2, b2 = linear_init(ks[2], H, H)
    condition = jax.random.normal(ks[3], (B, COND_DIM), dtype=jnp.float32)
    wc, _ = linear_init(ks[4], C_IN, COND_DIM)   # cond_proj has no bias

    def ref_forward(x, cond=None):
        if cond is not None:
            x = x + cond @ wc.T
        h = x @ w1.T + b1
        h = h * jax.nn.sigmoid(h)
        return h @ w2.T + b2

    # One-time weight prep (simulates model init; hoisted out of the forward).
    params = prepare_timestep_embedding_params(w1, b1, w2, b2)
    params_c = prepare_timestep_embedding_params(w1, b1, w2, b2,
                                                 cond_proj_weight=wc)

    # --- default path: condition=None (cond_proj_dim=None) ---
    out = timestep_embedding(sample, params)
    out = jax.block_until_ready(out)
    ref = ref_forward(sample)
    assert out.shape == (B, H)
    assert jnp.allclose(out, ref, atol=2e-2, rtol=2e-2), (
        float(jnp.max(jnp.abs(out - ref))))

    # --- optional cond_proj path ---
    out_c = timestep_embedding(sample, params_c, condition=condition)
    out_c = jax.block_until_ready(out_c)
    ref_c = ref_forward(sample, condition)
    assert out_c.shape == (B, H)
    assert jnp.allclose(out_c, ref_c, atol=2e-2, rtol=2e-2), (
        float(jnp.max(jnp.abs(out_c - ref_c))))

    print("KERNEL_OK")
</pallas_src>

<mosaic_0001>
module attributes {stable_mosaic.version = 11 : i64} {
  func.func @_timestep_embed_kernel(%arg0: i32, %arg1: memref<8x32xf32, #tpu.memory_space<vmem>>, %arg2: memref<32x128xbf16, #tpu.memory_space<vmem>>, %arg3: memref<1x128xf32, #tpu.memory_space<vmem>>, %arg4: memref<128x128xbf16, #tpu.memory_space<vmem>>, %arg5: memref<1x128xf32, #tpu.memory_space<vmem>>, %arg6: memref<8x128xf32, #tpu.memory_space<vmem>>) attributes {dimension_semantics = [#tpu.dimension_semantics<parallel>], iteration_bounds = array<i64: 1>, scalar_prefetch = 0 : i64, scratch_operands = 0 : i64, tpu.core_type = #tpu.core_type<tc>, window_params = [{transform_indices = @transform_0, window_bounds = array<i64: 8, 32>}, {pipeline_mode = #tpu.pipeline_mode<synchronous>, transform_indices = @transform_1, window_bounds = array<i64: 32, 128>}, {pipeline_mode = #tpu.pipeline_mode<synchronous>, transform_indices = @transform_2, window_bounds = array<i64: 1, 128>}, {pipeline_mode = #tpu.pipeline_mode<synchronous>, transform_indices = @transform_3, window_bounds = array<i64: 128, 128>}, {pipeline_mode = #tpu.pipeline_mode<synchronous>, transform_indices = @transform_4, window_bounds = array<i64: 1, 128>}, {transform_indices = @transform_5, window_bounds = array<i64: 8, 128>}]} {
    %c0 = arith.constant 0 : index
    %c0_0 = arith.constant 0 : index
    %0 = vector.load %arg1[%c0, %c0_0] : memref<8x32xf32, #tpu.memory_space<vmem>>, vector<8x32xf32>
    %1 = arith.truncf %0 : vector<8x32xf32> to vector<8x32xbf16>
    %c0_1 = arith.constant 0 : index
    %c0_2 = arith.constant 0 : index
    %2 = vector.load %arg2[%c0_1, %c0_2] : memref<32x128xbf16, #tpu.memory_space<vmem>>, vector<32x128xbf16>
    %cst = arith.constant dense<0.000000e+00> : vector<8x128xf32>
    %3 = tpu.matmul %1, %2, %cst {dimension_numbers = #tpu.dot_dimension_numbers<[1], [0], [0], [1], [0, 0, 1, 1], [], []>} : vector<8x32xbf16>, vector<32x128xbf16>, vector<8x128xf32> -> vector<8x128xf32>
    %c0_3 = arith.constant 0 : index
    %c0_4 = arith.constant 0 : index
    %4 = vector.load %arg3[%c0_3, %c0_4] : memref<1x128xf32, #tpu.memory_space<vmem>>, vector<1x128xf32>
    %5 = vector.broadcast %4 : vector<1x128xf32> to vector<8x128xf32>
    %6 = arith.addf %3, %5 : vector<8x128xf32>
    %cst_5 = arith.constant 0.000000e+00 : f32
    %7 = vector.broadcast %cst_5 : f32 to vector<8x128xf32>
    %8 = arith.subf %7, %6 : vector<8x128xf32>
    %9 = math.exp %8 : vector<8x128xf32>
    %cst_6 = arith.constant 1.000000e+00 : f32
    %10 = vector.broadcast %cst_6 : f32 to vector<8x128xf32>
    %11 = arith.addf %10, %9 : vector<8x128xf32>
    %12 = tpu.reciprocal %11 {approx = true} : vector<8x128xf32> -> vector<8x128xf32>
    %13 = arith.mulf %6, %12 : vector<8x128xf32>
    %14 = arith.truncf %13 : vector<8x128xf32> to vector<8x128xbf16>
    %c0_7 = arith.constant 0 : index
    %c0_8 = arith.constant 0 : index
    %15 = vector.load %arg4[%c0_7, %c0_8] : memref<128x128xbf16, #tpu.memory_space<vmem>>, vector<128x128xbf16>
    %cst_9 = arith.constant dense<0.000000e+00> : vector<8x128xf32>
    %16 = tpu.matmul %14, %15, %cst_9 {dimension_numbers = #tpu.dot_dimension_numbers<[1], [0], [0], [1], [0, 0, 1, 1], [], []>} : vector<8x128xbf16>, vector<128x128xbf16>, vector<8x128xf32> -> vector<8x128xf32>
    %c0_10 = arith.constant 0 : index
    %c0_11 = arith.constant 0 : index
    %17 = vector.load %arg5[%c0_10, %c0_11] : memref<1x128xf32, #tpu.memory_space<vmem>>, vector<1x128xf32>
    %18 = vector.broadcast %17 : vector<1x128xf32> to vector<8x128xf32>
    %19 = arith.addf %16, %18 : vector<8x128xf32>
    %c0_12 = arith.constant 0 : index
    %c0_13 = arith.constant 0 : index
    %20 = vector.load %arg6[%c0_12, %c0_13] : memref<8x128xf32, #tpu.memory_space<vmem>>, vector<8x128xf32>
    tpu.vector_store %arg6[%c0_12, %c0_13], %19 {strides = array<i32>} : memref<8x128xf32, #tpu.memory_space<vmem>>, vector<8x128xf32>,
    return
  }
  func.func @transform_0(%arg0: i32) -> (i32, i32) {
    %c0_i32 = arith.constant 0 : i32
    %c0_i32_0 = arith.constant 0 : i32
    return %arg0, %c0_i32 : i32, i32
  }
  func.func @transform_1(%arg0: i32) -> (i32, i32) {
    %c0_i32 = arith.constant 0 : i32
    %c0_i32_0 = arith.constant 0 : i32
    %c0_i32_1 = arith.constant 0 : i32
    return %c0_i32, %c0_i32_0 : i32, i32
  }
  func.func @transform_2(%arg0: i32) -> (i32, i32) {
    %c0_i32 = arith.constant 0 : i32
    %c0_i32_0 = arith.constant 0 : i32
    %c0_i32_1 = arith.constant 0 : i32
    return %c0_i32, %c0_i32_0 : i32, i32
  }
  func.func @transform_3(%arg0: i32) -> (i32, i32) {
    %c0_i32 = arith.constant 0 : i32
    %c0_i32_0 = arith.constant 0 : i32
    %c0_i32_1 = arith.constant 0 : i32
    return %c0_i32, %c0_i32_0 : i32, i32
  }
  func.func @transform_4(%arg0: i32) -> (i32, i32) {
    %c0_i32 = arith.constant 0 : i32
    %c0_i32_0 = arith.constant 0 : i32
    %c0_i32_1 = arith.constant 0 : i32
    return %c0_i32, %c0_i32_0 : i32, i32
  }
  func.func @transform_5(%arg0: i32) -> (i32, i32) {
    %c0_i32 = arith.constant 0 : i32
    %c0_i32_0 = arith.constant 0 : i32
    return %arg0, %c0_i32 : i32, i32
  }
}

</mosaic_0001>

<llo_original>
// kernel: tpu_custom_call.1
$region0: #{tpu_custom_call.1}
  #allocation0 [shape = 'u32[]', space=smem, size = 0x4, offset = 0x4, fixed_abs, tag = 'smem constant byte address 0x4 - core index']
  #allocation1 [shape = 'u32[72,128]{1,0:T(1,128)}', space=vmem, size = 0x9000, scoped, tag = 'internal scratch']
  %s0 = inlined_call_operand.hbm [shape: f32[8,32], index: 0, kind: input, shape index: {}]
  %s1 = inlined_call_operand.hbm [shape: bf16[32,128], index: 1, kind: input, shape index: {}]
  %s2 = inlined_call_operand.vmem [shape: f32[1,128], index: 2, kind: input, shape index: {}]
  %s3 = inlined_call_operand.hbm [shape: bf16[128,128], index: 3, kind: input, shape index: {}]
  %s4 = inlined_call_operand.vmem [shape: f32[1,128], index: 4, kind: input, shape index: {}]
  %s5 = inlined_call_operand.hbm [shape: f32[8,128], index: 5, kind: output, shape index: {}]
  %s6 = sld [smem:[#allocation0]]
  $region42: #{tpu_custom_call.1} parent=0
    _
  %s8 = ssub.s32 1, %s6
  %s9 = scalar_select 0, %s8, %s6
  $region1: #{tpu_custom_call.1} parent=0
    #allocation2 [shape = 'u8[4096]{0}', space=vmem, size = 0x1000, scoped, tag = 'input window, operand 0, single buffered']
    #allocation3 [shape = 's32[1]{0}', space=sflag, size = 0x4, scoped, tag = 'scoped memory for tpu_custom_call.1']
    #allocation4 [shape = 's32[1]{0}', space=sflag, size = 0x4, scoped, tag = 'scoped memory for tpu_custom_call.1']
    #allocation5 [shape = 'u8[8192]{0}', space=vmem, size = 0x2000, scoped, tag = 'input window, operand 1, single buffered']
    #allocation6 [shape = 's32[1]{0}', space=sflag, size = 0x4, scoped, tag = 'scoped memory for tpu_custom_call.1']
    #allocation7 [shape = 'u8[32768]{0}', space=vmem, size = 0x8000, scoped, tag = 'input window, operand 3, single buffered']
    #allocation8 [shape = 'u8[4096]{0}', space=vmem, size = 0x1000, scoped, tag = 'output window, operand 0, single buffered']
    %10 = vsyncpa [#allocation3], 0
    %11 = vsyncpa [#allocation6], 0
    %12 = vsyncpa [#allocation4], 0
    // Predicated region
    $region2: #{tpu_custom_call.1} parent=1 // pred_check
      _
    $region3: #{tpu_custom_call.1} parent=1 // pred_check_branch
      %14 = sbr.rel (0) target = $region5
    $region4: #{tpu_custom_call.1} parent=1 // pred_region
      %16 = vsyncadd [#allocation3], 0
      %s18 = sshll.u32 %s0, 4
      %s19 = int_to_ptr.hbm [resolvable:$true] %s18
      %s20 = sshll.u32 [#allocation2], 4
      %s21 = int_to_ptr.vmem [resolvable:$true] %s20
      %23 = dma.hbm_to_vmem [thread:$0]  %s19, 128, %s21, [#allocation3]
    $region5: #{tpu_custom_call.1} parent=1 // pred_fallthru
      _
    // Predicated region
    $region6: #{tpu_custom_call.1} parent=1 // pred_check
      _
    $region7: #{tpu_custom_call.1} parent=1 // pred_check_branch
      %25 = sbr.rel (0) target = $region9
    $region8: #{tpu_custom_call.1} parent=1 // pred_region
      %27 = vsyncadd [#allocation6], 0
      %s28 = sshll.u32 %s1, 4
      %s29 = int_to_ptr.hbm [resolvable:$true] %s28
      %s30 = sshll.u32 [#allocation5], 4
      %s31 = int_to_ptr.vmem [resolvable:$true] %s30
      %36 = dma.hbm_to_vmem [thread:$0]  %s29, 256, %s31, [#allocation6], 64, 64, 4
    $region9: #{tpu_custom_call.1} parent=1 // pred_fallthru
      _
    // Predicated region
    $region10: #{tpu_custom_call.1} parent=1 // pred_check
      _
    $region11: #{tpu_custom_call.1} parent=1 // pred_check_branch
      %38 = sbr.rel (0) target = $region13
    $region12: #{tpu_custom_call.1} parent=1 // pred_region
      _
    $region13: #{tpu_custom_call.1} parent=1 // pred_fallthru
      _
    // Predicated region
    $region14: #{tpu_custom_call.1} parent=1 // pred_check
      _
    $region15: #{tpu_custom_call.1} parent=1 // pred_check_branch
      %40 = sbr.rel (0) target = $region17
    $region16: #{tpu_custom_call.1} parent=1 // pred_region
      %42 = vsyncadd [#allocation6], 0
      %s43 = sshll.u32 %s3, 4
      %s44 = int_to_ptr.hbm [resolvable:$true] %s43
      %s45 = sshll.u32 [#allocation7], 4
      %s46 = int_to_ptr.vmem [resolvable:$true] %s45
      %51 = dma.hbm_to_vmem [thread:$0]  %s44, 1024, %s46, [#allocation6], 64, 64, 4
    $region17: #{tpu_custom_call.1} parent=1 // pred_fallthru
      _
    // Predicated region
    $region18: #{tpu_custom_call.1} parent=1 // pred_check
      _
    $region19: #{tpu_custom_call.1} parent=1 // pred_check_branch
      %53 = sbr.rel (0) target = $region21
    $region20: #{tpu_custom_call.1} parent=1 // pred_region
      _
    $region21: #{tpu_custom_call.1} parent=1 // pred_fallthru
      _
    // Predicated region
    $region22: #{tpu_custom_call.1} parent=1 // pred_check
      _
    $region23: #{tpu_custom_call.1} parent=1 // pred_check_branch
      %55 = sbr.rel (0) target = $region25
    $region24: #{tpu_custom_call.1} parent=1 // pred_region
      %57 = dma.done [#allocation3], 128
    $region25: #{tpu_custom_call.1} parent=1 // pred_fallthru
      _
    // Predicated region
    $region26: #{tpu_custom_call.1} parent=1 // pred_check
      _
    $region27: #{tpu_custom_call.1} parent=1 // pred_check_branch
      %59 = sbr.rel (0) target = $region29
    $region28: #{tpu_custom_call.1} parent=1 // pred_region
      %61 = dma.done [#allocation6], 256
    $region29: #{tpu_custom_call.1} parent=1 // pred_fallthru
      _
    // Predicated region
    $region30: #{tpu_custom_call.1} parent=1 // pred_check
      _
    $region31: #{tpu_custom_call.1} parent=1 // pred_check_branch
      %63 = sbr.rel (0) target = $region33
    $region32: #{tpu_custom_call.1} parent=1 // pred_region
      %65 = dma.done [#allocation6], 1024
    $region33: #{tpu_custom_call.1} parent=1 // pred_fallthru
      _
    %v67 = vld [vmem:[#allocation2] sm:$0xff]
    %v68 = vpack.c.bf16 %v67, %v67
    %v69 = vld [vmem:[#allocation5] sm:$0xf]
    %v70 = vld [vmem:[#allocation5 + $0x4] sm:$0xf]
    %v71 = vld [vmem:[#allocation5 + $0x8] sm:$0xf]
    %v72 = vld [vmem:[#allocation5 + $0xc] sm:$0xf]
    %v73 = vld [vmem:[%s2] sm:$0x1]
    %v75 = vperm.slane %v73, 0
    %v81 = vunpack.c.l.b16 %v69
    %v82 = vunpack.c.l.b16 %v70
    %v83 = vunpack.c.l.b16 %v71
    %v84 = vunpack.c.l.b16 %v72
    %v85 = vpack.c.b16 %v82, %v81
    %v86 = vpack.c.b16 %v84, %v83
    %vm89 = vcmask 261120
    %v91 = vsel %vm89, %v68, 0
    %93 = vmatpush.bf16.msra.mxu0 0
    %94 = vmatpush.bf16.msra.mxu0 0
    %95 = vmatpush.bf16.msra.mxu0 0
    %96 = vmatpush.bf16.msra.mxu0 0
    %97 = vmatpush.bf16.msra.mxu0 0
    %98 = vmatpush.bf16.msra.mxu0 0
    %99 = vmatpush.bf16.msra.mxu0 %v86
    %100 = vmatpush.bf16.msra.mxu0 %v85
    %101 = vmatmul.bf16.gmra.mxu0 %v91
    %v102 = vpop.f32.mrf.mxu0
    %v103 = vadd.f32 %v75, %v102
    %v104 = vpop.f32.mrf.mxu0
    %105 = vdwg.mxu0
    %v106 = vsub.f32 0.0, %v103
    %v107 = vmul.f32 %v106, 1.442695
    %v108 = vpow.pop %v107
    %v109 = vadd.f32 %v108, 1.0
    %v110 = vrcp.pop %v109
    %v111 = vmul.f32 %v103, %v110
    %v112 = vpack.c.bf16 %v111, %v111
    %v113 = vld [vmem:[#allocation7] sm:$0xf]
    %v114 = vld [vmem:[#allocation7 + $0x4] sm:$0xf]
    %v115 = vld [vmem:[#allocation7 + $0x8] sm:$0xf]
    %v116 = vld [vmem:[#allocation7 + $0xc] sm:$0xf]
    %v117 = vld [vmem:[#allocation7 + $0x10] sm:$0xf]
    %v118 = vld [vmem:[#allocation7 + $0x14] sm:$0xf]
    %v119 = vld [vmem:[#allocation7 + $0x18] sm:$0xf]
    %v120 = vld [vmem:[#allocation7 + $0x1c] sm:$0xf]
    %v121 = vld [vmem:[#allocation7 + $0x20] sm:$0xf]
    %v122 = vld [vmem:[#allocation7 + $0x24] sm:$0xf]
    %v123 = vld [vmem:[#allocation7 + $0x28] sm:$0xf]
    %v124 = vld [vmem:[#allocation7 + $0x2c] sm:$0xf]
    %v125 = vld [vmem:[#allocation7 + $0x30] sm:$0xf]
    %v126 = vld [vmem:[#allocation7 + $0x34] sm:$0xf]
    %v127 = vld [vmem:[#allocation7 + $0x38] sm:$0xf]
    %v128 = vld [vmem:[#allocation7 + $0x3c] sm:$0xf]
    %v129 = vld [vmem:[%s4] sm:$0x1]
    %v131 = vperm.slane %v129, 0
    %v149 = vunpack.c.l.b16 %v113
    %v150 = vunpack.c.l.b16 %v114
    %v151 = vunpack.c.l.b16 %v115
    %v152 = vunpack.c.l.b16 %v116
    %v153 = vunpack.c.l.b16 %v117
    %v154 = vunpack.c.l.b16 %v118
    %v155 = vunpack.c.l.b16 %v119
    %v156 = vunpack.c.l.b16 %v120
    %v157 = vunpack.c.l.b16 %v121
    %v158 = vunpack.c.l.b16 %v122
    %v159 = vunpack.c.l.b16 %v123
    %v160 = vunpack.c.l.b16 %v124
    %v161 = vunpack.c.l.b16 %v125
    %v162 = vunpack.c.l.b16 %v126
    %v163 = vunpack.c.l.b16 %v127
    %v164 = vunpack.c.l.b16 %v128
    %v165 = vpack.c.b16 %v150, %v149
    %v166 = vpack.c.b16 %v152, %v151
    %v167 = vpack.c.b16 %v154, %v153
    %v168 = vpack.c.b16 %v156, %v155
    %v169 = vpack.c.b16 %v158, %v157
    %v170 = vpack.c.b16 %v160, %v159
    %v171 = vpack.c.b16 %v162, %v161
    %v172 = vpack.c.b16 %v164, %v163
    %181 = vmatpush.bf16.msra.mxu0 %v172
    %182 = vmatpush.bf16.msra.mxu0 %v171
    %183 = vmatpush.bf16.msra.mxu0 %v170
    %184 = vmatpush.bf16.msra.mxu0 %v169
    %185 = vmatpush.bf16.msra.mxu0 %v168
    %186 = vmatpush.bf16.msra.mxu0 %v167
    %187 = vmatpush.bf16.msra.mxu0 %v166
    %188 = vmatpush.bf16.msra.mxu0 %v165
    %189 = vmatmul.bf16.gmra.mxu0 %v112
    %v190 = vpop.f32.mrf.mxu0
    %v191 = vadd.f32 %v131, %v190
    %v192 = vpop.f32.mrf.mxu0
    %193 = vdwg.mxu0
    %194 = vst [vmem:[#allocation8] sm:$0xff] %v191
    // Predicated region
    $region34: #{tpu_custom_call.1} parent=1 // pred_check
      _
    $region35: #{tpu_custom_call.1} parent=1 // pred_check_branch
      %196 = sbr.rel (0) target = $region37
    $region36: #{tpu_custom_call.1} parent=1 // pred_region
      %198 = vsyncadd [#allocation4], 0
      %s200 = sshll.u32 [#allocation8], 4
      %s201 = int_to_ptr.vmem [resolvable:$true] %s200
      %s202 = sshll.u32 %s5, 4
      %s203 = int_to_ptr.hbm [resolvable:$true] %s202
      %205 = dma.vmem_to_hbm [thread:$0]  %s201, 128, %s203, [#allocation4]
    $region37: #{tpu_custom_call.1} parent=1 // pred_fallthru
      _
    // Predicated region
    $region38: #{tpu_custom_call.1} parent=1 // pred_check
      _
    $region39: #{tpu_custom_call.1} parent=1 // pred_check_branch
      %207 = sbr.rel (0) target = $region41
    $region40: #{tpu_custom_call.1} parent=1 // pred_region
      %209 = dma.done [#allocation4], 128
    $region41: #{tpu_custom_call.1} parent=1 // pred_fallthru
      _
    %210 = vsyncpa [#allocation3], 1
    %211 = vsyncpa [#allocation6], 1
    %212 = vsyncpa [#allocation4], 1

</llo_original>
